<compile_context>
chip_gen: v6e
topology: v6e:2x2x1
jax: 0.10.0
libtpu: 0.0.40
codegen_flags: <defaults>
</compile_context>

<pallas_src>
import jax
import jax.numpy as jnp
from jax.experimental import pallas as pl
from jax.experimental.pallas import tpu as pltpu


# ----------------------------------------------------------------------------
# Zero-HBM-traffic pallas shell: output buffer aliases input buffer, body no-op.
# ----------------------------------------------------------------------------
def _noop_kernel(x_hbm_ref, o_hbm_ref):
    # Output is the same HBM buffer as the input (input_output_aliases={0: 0}),
    # so identity requires no data movement inside the kernel at all.
    del x_hbm_ref, o_hbm_ref


def _identity_alias(x: jax.Array) -> jax.Array:
    if x.size == 0:
        return x
    return pl.pallas_call(
        _noop_kernel,
        out_shape=jax.ShapeDtypeStruct(x.shape, x.dtype),
        in_specs=[pl.BlockSpec(memory_space=pl.ANY)],
        out_specs=pl.BlockSpec(memory_space=pl.ANY),
        input_output_aliases={0: 0},
    )(x)


# ----------------------------------------------------------------------------
# Materialized copy: single HBM->HBM DMA (no VMEM round-trip, no grid,
# no wrapper-side pad/reshape/slice passes).
# ----------------------------------------------------------------------------
def _dma_copy_kernel(x_hbm_ref, o_hbm_ref, sem):
    cp = pltpu.make_async_copy(x_hbm_ref, o_hbm_ref, sem)
    cp.start()
    cp.wait()


def _identity_copy(x: jax.Array) -> jax.Array:
    if x.size == 0:
        return x
    return pl.pallas_call(
        _dma_copy_kernel,
        out_shape=jax.ShapeDtypeStruct(x.shape, x.dtype),
        in_specs=[pl.BlockSpec(memory_space=pl.ANY)],
        out_specs=pl.BlockSpec(memory_space=pl.ANY),
        scratch_shapes=[pltpu.SemaphoreType.DMA(())],
    )(x)


# ----------------------------------------------------------------------------
# Public wrapper (matches nn.Identity.forward semantics: y = x).
# ----------------------------------------------------------------------------
def identity_pallas(x: jax.Array, *, mode: str = "zero_copy") -> jax.Array:
    """Identity forward pass.

    mode="zero_copy" (default): return x directly — zero HBM traffic, zero cost.
    mode="alias":      pallas_call shell with input/output buffer aliasing and a
                       no-op body.  Zero data movement only if the caller donates
                       the input buffer (jit donate_argnums); otherwise XLA adds
                       a defensive copy before the call.
    mode="copy":       single HBM->HBM DMA into a fresh buffer (roofline-minimal
                       read+write traffic, no VMEM staging).
    """
    if mode == "zero_copy":
        return x
    if mode == "alias":
        return _identity_alias(x)
    if mode == "copy":
        return _identity_copy(x)
    raise ValueError(f"unknown mode: {mode!r}")


if __name__ == "__main__":
    key = jax.random.PRNGKey(0)
    # NCHW-style input consistent with the module's usage context.
    x = jax.random.normal(key, (2, 4, 16, 16), dtype=jnp.float32)

    # Production path: zero-cost pass-through.
    y0 = jax.block_until_ready(identity_pallas(x))
    assert y0.shape == x.shape and y0.dtype == x.dtype
    assert bool(jnp.array_equal(y0, x))

    # Aliased pallas shell: no-op kernel, output aliases input buffer.
    y1 = jax.block_until_ready(identity_pallas(x, mode="alias"))
    assert y1.shape == x.shape and y1.dtype == x.dtype
    assert bool(jnp.array_equal(y1, x))

    # Materialized copy: one HBM->HBM DMA into a fresh buffer.
    y2 = jax.block_until_ready(identity_pallas(x, mode="copy"))
    assert y2.shape == x.shape and y2.dtype == x.dtype
    assert bool(jnp.array_equal(y2, x))

    # Also exercise the copy path on a non-(8,128)-aligned shape to confirm the
    # DMA path has no layout/padding requirements.
    x3 = jax.random.normal(jax.random.PRNGKey(1), (3, 5, 7), dtype=jnp.bfloat16)
    y3 = jax.block_until_ready(identity_pallas(x3, mode="copy"))
    assert y3.shape == x3.shape and y3.dtype == x3.dtype
    assert bool(jnp.array_equal(y3, x3))

    print("KERNEL_OK")
</pallas_src>

<mosaic_0001>
module attributes {stable_mosaic.version = 11 : i64} {
  func.func @_noop_kernel(%arg0: memref<2x4x16x16xf32, #tpu.memory_space<any>>, %arg1: memref<2x4x16x16xf32, #tpu.memory_space<any>>) attributes {dimension_semantics = [], scalar_prefetch = 0 : i64, scratch_operands = 0 : i64, tpu.core_type = #tpu.core_type<tc>} {
    return
  }
}

</mosaic_0001>

<llo_original>
// kernel: tpu_custom_call.1
$region0: #{tpu_custom_call.1}
  #allocation0 [shape = 'u32[]', space=smem, size = 0x4, offset = 0x4, fixed_abs, tag = 'smem constant byte address 0x4 - core index']
  #allocation1 [shape = 'u32[144,128]{1,0:T(1,128)}', space=vmem, size = 0x12000, scoped, tag = 'internal scratch']
  %s0 = inlined_call_operand.hbm [shape: f32[2,4,16,16], index: 0, kind: input, shape index: {}, may-alias: {0,1}]
  %s1 = inlined_call_operand.hbm [shape: f32[2,4,16,16], index: 1, kind: output, shape index: {}, may-alias: {0,1}]
  %s2 = sld [smem:[#allocation0]]
  $region2: #{tpu_custom_call.1} parent=0
    _
  %s4 = ssub.s32 1, %s2
  %s5 = scalar_select 0, %s4, %s2

</llo_original>
